<compile_context>
chip_gen: v7x
topology: tpu7x:2x2x1
jax: 0.10.0
libtpu: 0.0.40
codegen_flags: <defaults>
</compile_context>

<pallas_src>
import functools
from collections import namedtuple

import jax
import jax.numpy as jnp
from jax import lax
from jax.experimental import pallas as pl
from jax.experimental.pallas import tpu as pltpu

Loss = namedtuple(
    "Loss",
    ["rpn_box_loss", "rpn_cls_loss", "rcnn_box_loss", "rcnn_cls_loss", "total_loss"],
)

_LANES = 128


# -----------------------------------------------------------------------------
# In-kernel helpers (lane-dense layout: N on the last/lane axis)
# -----------------------------------------------------------------------------
def _box_loss(box_slab, lbl, sigma):
    """__targets_loss__ on a packed (B, 8, N) slab: rows 0:4 = preds, rows 4:8 = gt targets.

    lbl is (B, 1, N) int32.  Ignored / padded lanes (label < 0) get weight 0 and do not count
    in the denominator, so lane padding is exact.
    """
    sigma2 = float(sigma) * float(sigma)
    w = (lbl > 0).astype(jnp.float32)                          # (B, 1, N)
    diff = w * (box_slab[:, 0:4, :] - box_slab[:, 4:8, :])     # (B, 4, N), sublane broadcast
    ad = jnp.abs(diff)
    y = jnp.where(ad < (1.0 / sigma2),
                  (0.5 * sigma2) * diff * diff,
                  ad - 0.5 / sigma2)
    # NOTE: matches the torch module exactly (no max(count, 1) guard); all-ignored labels
    # would produce inf/nan, same as the reference implementation.
    return jnp.sum(y) / jnp.sum((lbl >= 0).astype(jnp.float32))


def _cls_loss(score, lbl):
    """__class_loss__ on (B, C, N) scores, (B, 1, N) int32 labels (ignore_index=-1)."""
    B = score.shape[0]
    # Class axis is a <=5-row sublane axis: these reductions are cheap; lanes stay dense.
    m = jnp.max(score, axis=1, keepdims=True)                  # (B, 1, N)
    se = jnp.sum(jnp.exp(score - m), axis=1, keepdims=True)    # (B, 1, N)
    lse = m + jnp.log(se)                                      # (B, 1, N)
    cls_iota = lax.broadcasted_iota(jnp.int32, score.shape, 1)
    picked = jnp.sum(jnp.where(cls_iota == lbl, score, 0.0), axis=1, keepdims=True)
    valid = lbl >= 0                                           # (B, 1, N)
    nll = jnp.where(valid, lse - picked, 0.0)                  # (B, 1, N)
    sum_b = jnp.sum(nll, axis=-1)                              # (B, 1)
    cnt_b = jnp.sum(valid.astype(jnp.float32), axis=-1)        # (B, 1)
    return jnp.sum(sum_b / cnt_b) / float(B)


# -----------------------------------------------------------------------------
# Fused kernel: all four losses + total in one pallas_call (no grid, whole problem in VMEM)
# -----------------------------------------------------------------------------
def _fused_loss_kernel(rpn_box_ref, rpn_score_ref, rpn_lbl_ref,
                       roi_box_ref, roi_score_ref, roi_lbl_ref,
                       out_ref, *, rpn_sigma, rcnn_sigma):
    # Cast to f32 at the ref read (no-op for f32 producers, halves DMA bytes for bf16 ones).
    # All arithmetic stays f32 (v5e has no bf16 VPU/EUP path).
    rpn_box = rpn_box_ref[...].astype(jnp.float32)             # (B, 8, Na)
    roi_box = roi_box_ref[...].astype(jnp.float32)             # (B, 8, Nr)
    rpn_score = rpn_score_ref[...].astype(jnp.float32)         # (B, C1, Na)
    roi_score = roi_score_ref[...].astype(jnp.float32)         # (B, C2, Nr)
    rpn_lbl = rpn_lbl_ref[...]                                 # (B, 1, Na) int32
    roi_lbl = roi_lbl_ref[...]                                 # (B, 1, Nr) int32

    rpn_box_l = _box_loss(rpn_box, rpn_lbl, rpn_sigma)
    rpn_cls_l = _cls_loss(rpn_score, rpn_lbl)
    rcnn_box_l = _box_loss(roi_box, roi_lbl, rcnn_sigma)
    rcnn_cls_l = _cls_loss(roi_score, roi_lbl)

    out_ref[0] = rpn_box_l
    out_ref[1] = rpn_cls_l
    out_ref[2] = rcnn_box_l
    out_ref[3] = rcnn_cls_l
    out_ref[4] = rpn_box_l + rpn_cls_l + rcnn_box_l + rcnn_cls_l


def _pad_lanes(x, pad_value):
    """Pad the lane (last) axis to a multiple of 128. No-op (elided under jit) when aligned."""
    rem = (-x.shape[-1]) % _LANES
    if rem:
        widths = [(0, 0)] * (x.ndim - 1) + [(0, rem)]
        x = jnp.pad(x, widths, constant_values=pad_value)
    return x


@jax.jit
def frcnn_trainer_forward(rpn_targets, gt_anchor_targets, gt_anchor_label, rpn_score,
                          roi_targets, gt_bbox_targets, gt_bbox_label, roi_scores):
    """Pallas-backed FRCNNTrainer.forward() loss aggregation (single fused kernel).

    Channel-first (lane-dense) inputs -- no wrapper transposes:
      rpn_targets, gt_anchor_targets : (B, 4, Na)   native dtype (f32 or bf16)
      rpn_score                      : (B, C1, Na)
      gt_anchor_label                : (B, Na)      int labels, -1 = ignore
      roi_targets, gt_bbox_targets   : (B, 4, Nr)
      roi_scores                     : (B, C2, Nr)
      gt_bbox_label                  : (B, Nr)
    """
    # Pack preds + gt targets into one full-sublane (B, 8, N) slab per head (8 -> 6 DMAs),
    # labels as int32 (B, 1, N).  Lane padding (value 0 / label -1) keeps lanes dense & exact.
    rpn_box = _pad_lanes(jnp.concatenate([rpn_targets, gt_anchor_targets], axis=1), 0)
    roi_box = _pad_lanes(jnp.concatenate([roi_targets, gt_bbox_targets], axis=1), 0)
    rpn_s = _pad_lanes(rpn_score, 0)
    roi_s = _pad_lanes(roi_scores, 0)
    rpn_l = _pad_lanes(gt_anchor_label.astype(jnp.int32)[:, None, :], -1)
    roi_l = _pad_lanes(gt_bbox_label.astype(jnp.int32)[:, None, :], -1)

    kernel = functools.partial(_fused_loss_kernel, rpn_sigma=3.0, rcnn_sigma=1.0)
    vmem = pl.BlockSpec(memory_space=pltpu.MemorySpace.VMEM)

    out = pl.pallas_call(
        kernel,
        out_shape=jax.ShapeDtypeStruct((5,), jnp.float32),
        in_specs=[vmem] * 6,
        out_specs=pl.BlockSpec(memory_space=pltpu.MemorySpace.SMEM),
        # Advisory: tiny custom call -> let XLA overlap it with neighboring ops.
        cost_estimate=pl.CostEstimate(flops=60_000, transcendentals=2_500,
                                      bytes_accessed=45_000),
    )(rpn_box, rpn_s, rpn_l, roi_box, roi_s, roi_l)

    return Loss(out[0], out[1], out[2], out[3], out[4])


# -----------------------------------------------------------------------------
# Pure-JAX references (for correctness check of the kernel); torch layout (B, N, C)
# -----------------------------------------------------------------------------
def _ref_targets_loss(targets, gt_targets, gt_labels, sigma):
    w = (gt_labels > 0).astype(jnp.float32)[..., None]
    diff = w * (targets - gt_targets)
    ad = jnp.abs(diff)
    sigma2 = float(sigma) ** 2
    flag = (ad < 1.0 / sigma2).astype(jnp.float32)
    y = flag * 0.5 * sigma2 * diff * diff + (1.0 - flag) * (ad - 0.5 / sigma2)
    return jnp.sum(y) / jnp.sum((gt_labels >= 0).astype(jnp.float32))


def _ref_class_loss(scores, labels):
    li = labels.astype(jnp.int32)
    lse = jax.scipy.special.logsumexp(scores, axis=-1)
    picked = jnp.take_along_axis(scores, jnp.maximum(li, 0)[..., None], axis=-1)[..., 0]
    valid = li >= 0
    nll = jnp.where(valid, lse - picked, 0.0)
    per_b = jnp.sum(nll, axis=1) / jnp.sum(valid.astype(jnp.float32), axis=1)
    return jnp.mean(per_b)


if __name__ == "__main__":
    key = jax.random.PRNGKey(0)
    ks = jax.random.split(key, 8)

    B = 2
    N_ANCH = 256          # AnchorTargetGenerator.num_samples
    N_ROI = 128           # ProposalTargetGenerator.num_samples
    NUM_CLASSES = 4       # foreground classes; RCNN scores include background -> 5

    # Synthetic stand-ins for network / target-generator outputs (see TODO(synk) above),
    # emitted channels-first (B, C, N) so the wrapper needs no transposes.
    rpn_targets = jax.random.normal(ks[0], (B, 4, N_ANCH), jnp.float32)
    gt_anchor_targets = jax.random.normal(ks[1], (B, 4, N_ANCH), jnp.float32)
    # RPN anchor labels: {-1 ignore, 0 background, 1 foreground}
    gt_anchor_label = jax.random.randint(ks[2], (B, N_ANCH), -1, 2).astype(jnp.int32)
    rpn_score = jax.random.normal(ks[3], (B, 2, N_ANCH), jnp.float32)

    roi_targets = jax.random.normal(ks[4], (B, 4, N_ROI), jnp.float32)
    gt_bbox_targets = jax.random.normal(ks[5], (B, 4, N_ROI), jnp.float32)
    # RCNN roi labels: gt_label + 1 -> in [1, NUM_CLASSES]
    gt_bbox_label = jax.random.randint(ks[6], (B, N_ROI), 1, NUM_CLASSES + 1).astype(jnp.int32)
    roi_scores = jax.random.normal(ks[7], (B, NUM_CLASSES + 1, N_ROI), jnp.float32)

    loss = frcnn_trainer_forward(
        rpn_targets, gt_anchor_targets, gt_anchor_label, rpn_score,
        roi_targets, gt_bbox_targets, gt_bbox_label, roi_scores,
    )
    jax.block_until_ready(loss.total_loss)

    # Correctness check against pure-JAX reference (torch (B, N, C) layout).
    t = lambda x: jnp.transpose(x, (0, 2, 1))
    ref_rpn_box = _ref_targets_loss(t(rpn_targets), t(gt_anchor_targets), gt_anchor_label, 3)
    ref_rpn_cls = _ref_class_loss(t(rpn_score), gt_anchor_label)
    ref_rcnn_box = _ref_targets_loss(t(roi_targets), t(gt_bbox_targets), gt_bbox_label, 1)
    ref_rcnn_cls = _ref_class_loss(t(roi_scores), gt_bbox_label)
    ref_total = ref_rpn_box + ref_rpn_cls + ref_rcnn_box + ref_rcnn_cls

    assert jnp.allclose(loss.rpn_box_loss, ref_rpn_box, rtol=1e-5, atol=1e-5)
    assert jnp.allclose(loss.rpn_cls_loss, ref_rpn_cls, rtol=1e-5, atol=1e-5)
    assert jnp.allclose(loss.rcnn_box_loss, ref_rcnn_box, rtol=1e-5, atol=1e-5)
    assert jnp.allclose(loss.rcnn_cls_loss, ref_rcnn_cls, rtol=1e-5, atol=1e-5)
    assert jnp.allclose(loss.total_loss, ref_total, rtol=1e-5, atol=1e-5)

    print("KERNEL_OK")
</pallas_src>

<mosaic_0001>
module attributes {stable_mosaic.version = 11 : i64} {
  func.func @_fused_loss_kernel(%arg0: memref<2x8x256xf32, #tpu.memory_space<vmem>>, %arg1: memref<2x2x256xf32, #tpu.memory_space<vmem>>, %arg2: memref<2x1x256xi32, #tpu.memory_space<vmem>>, %arg3: memref<2x8x128xf32, #tpu.memory_space<vmem>>, %arg4: memref<2x5x128xf32, #tpu.memory_space<vmem>>, %arg5: memref<2x1x128xi32, #tpu.memory_space<vmem>>, %arg6: memref<5xf32, #tpu.memory_space<smem>>) attributes {dimension_semantics = [], scalar_prefetch = 0 : i64, scratch_operands = 0 : i64, tpu.core_type = #tpu.core_type<tc>} {
    %c0 = arith.constant 0 : index
    %c0_0 = arith.constant 0 : index
    %c0_1 = arith.constant 0 : index
    %0 = vector.load %arg0[%c0, %c0_0, %c0_1] : memref<2x8x256xf32, #tpu.memory_space<vmem>>, vector<2x8x256xf32>
    %c0_2 = arith.constant 0 : index
    %c0_3 = arith.constant 0 : index
    %c0_4 = arith.constant 0 : index
    %1 = vector.load %arg3[%c0_2, %c0_3, %c0_4] : memref<2x8x128xf32, #tpu.memory_space<vmem>>, vector<2x8x128xf32>
    %c0_5 = arith.constant 0 : index
    %c0_6 = arith.constant 0 : index
    %c0_7 = arith.constant 0 : index
    %2 = vector.load %arg1[%c0_5, %c0_6, %c0_7] : memref<2x2x256xf32, #tpu.memory_space<vmem>>, vector<2x2x256xf32>
    %c0_8 = arith.constant 0 : index
    %c0_9 = arith.constant 0 : index
    %c0_10 = arith.constant 0 : index
    %3 = vector.load %arg4[%c0_8, %c0_9, %c0_10] : memref<2x5x128xf32, #tpu.memory_space<vmem>>, vector<2x5x128xf32>
    %c0_11 = arith.constant 0 : index
    %c0_12 = arith.constant 0 : index
    %c0_13 = arith.constant 0 : index
    %4 = vector.load %arg2[%c0_11, %c0_12, %c0_13] : memref<2x1x256xi32, #tpu.memory_space<vmem>>, vector<2x1x256xi32>
    %c0_14 = arith.constant 0 : index
    %c0_15 = arith.constant 0 : index
    %c0_16 = arith.constant 0 : index
    %5 = vector.load %arg5[%c0_14, %c0_15, %c0_16] : memref<2x1x128xi32, #tpu.memory_space<vmem>>, vector<2x1x128xi32>
    %c0_i32 = arith.constant 0 : i32
    %6 = vector.broadcast %c0_i32 : i32 to vector<2x1x256xi32>
    %7 = arith.cmpi sgt, %4, %6 : vector<2x1x256xi32>
    %8 = arith.extui %7 : vector<2x1x256xi1> to vector<2x1x256xi32>
    %9 = arith.sitofp %8 : vector<2x1x256xi32> to vector<2x1x256xf32>
    %10 = vector.extract_strided_slice %0 {offsets = [0, 0, 0], sizes = [2, 4, 256], strides = [1, 1, 1]} : vector<2x8x256xf32> to vector<2x4x256xf32>
    %11 = vector.extract_strided_slice %0 {offsets = [0, 4, 0], sizes = [2, 4, 256], strides = [1, 1, 1]} : vector<2x8x256xf32> to vector<2x4x256xf32>
    %12 = arith.subf %10, %11 : vector<2x4x256xf32>
    %13 = vector.broadcast %9 : vector<2x1x256xf32> to vector<2x4x256xf32>
    %14 = arith.mulf %13, %12 : vector<2x4x256xf32>
    %15 = math.absf %14 : vector<2x4x256xf32>
    %cst = arith.constant 0.111111112 : f32
    %16 = vector.broadcast %cst : f32 to vector<2x4x256xf32>
    %17 = arith.cmpf olt, %15, %16 : vector<2x4x256xf32>
    %cst_17 = arith.constant 4.500000e+00 : f32
    %18 = vector.broadcast %cst_17 : f32 to vector<2x4x256xf32>
    %19 = arith.mulf %18, %14 : vector<2x4x256xf32>
    %20 = arith.mulf %19, %14 : vector<2x4x256xf32>
    %cst_18 = arith.constant 0.055555556 : f32
    %21 = vector.broadcast %cst_18 : f32 to vector<2x4x256xf32>
    %22 = arith.subf %15, %21 : vector<2x4x256xf32>
    %23 = arith.select %17, %20, %22 : vector<2x4x256xi1>, vector<2x4x256xf32>
    %24 = vector.shape_cast %23 : vector<2x4x256xf32> to vector<1x2x4x256xf32>
    %cst_19 = arith.constant dense<0.000000e+00> : vector<1xf32>
    %25 = vector.multi_reduction <add>, %24, %cst_19 [1, 2, 3] : vector<1x2x4x256xf32> to vector<1xf32>
    %26 = vector.shape_cast %25 : vector<1xf32> to vector<1x1x1x1xf32>
    %27 = vector.extract %26[0, 0, 0, 0] : f32 from vector<1x1x1x1xf32>
    %c0_i32_20 = arith.constant 0 : i32
    %28 = vector.broadcast %c0_i32_20 : i32 to vector<2x1x256xi32>
    %29 = arith.cmpi sge, %4, %28 : vector<2x1x256xi32>
    %30 = arith.extui %29 : vector<2x1x256xi1> to vector<2x1x256xi32>
    %31 = arith.sitofp %30 : vector<2x1x256xi32> to vector<2x1x256xf32>
    %32 = vector.shape_cast %31 : vector<2x1x256xf32> to vector<1x2x1x256xf32>
    %cst_21 = arith.constant dense<0.000000e+00> : vector<1xf32>
    %33 = vector.multi_reduction <add>, %32, %cst_21 [1, 2, 3] : vector<1x2x1x256xf32> to vector<1xf32>
    %34 = vector.shape_cast %33 : vector<1xf32> to vector<1x1x1x1xf32>
    %35 = vector.extract %34[0, 0, 0, 0] : f32 from vector<1x1x1x1xf32>
    %36 = arith.divf %27, %35 : f32
    %cst_22 = arith.constant dense<0xFF800000> : vector<2x256xf32>
    %37 = vector.multi_reduction <maximumf>, %2, %cst_22 [1] : vector<2x2x256xf32> to vector<2x256xf32>
    %38 = vector.shape_cast %37 : vector<2x256xf32> to vector<2x1x256xf32>
    %39 = vector.broadcast %38 : vector<2x1x256xf32> to vector<2x2x256xf32>
    %40 = arith.subf %2, %39 : vector<2x2x256xf32>
    %41 = math.exp %40 : vector<2x2x256xf32>
    %cst_23 = arith.constant dense<0.000000e+00> : vector<2x256xf32>
    %42 = vector.multi_reduction <add>, %41, %cst_23 [1] : vector<2x2x256xf32> to vector<2x256xf32>
    %43 = vector.shape_cast %42 : vector<2x256xf32> to vector<2x1x256xf32>
    %44 = math.log %43 : vector<2x1x256xf32>
    %45 = arith.addf %38, %44 : vector<2x1x256xf32>
    %46 = tpu.iota {dimensions = array<i32: 1>} : vector<2x2x256xi32>
    %47 = vector.broadcast %4 : vector<2x1x256xi32> to vector<2x2x256xi32>
    %48 = arith.cmpi eq, %46, %47 : vector<2x2x256xi32>
    %cst_24 = arith.constant 0.000000e+00 : f32
    %49 = vector.broadcast %cst_24 : f32 to vector<2x2x256xf32>
    %50 = arith.select %48, %2, %49 : vector<2x2x256xi1>, vector<2x2x256xf32>
    %cst_25 = arith.constant dense<0.000000e+00> : vector<2x256xf32>
    %51 = vector.multi_reduction <add>, %50, %cst_25 [1] : vector<2x2x256xf32> to vector<2x256xf32>
    %52 = vector.shape_cast %51 : vector<2x256xf32> to vector<2x1x256xf32>
    %c0_i32_26 = arith.constant 0 : i32
    %53 = vector.broadcast %c0_i32_26 : i32 to vector<2x1x256xi32>
    %54 = arith.cmpi sge, %4, %53 : vector<2x1x256xi32>
    %55 = arith.subf %45, %52 : vector<2x1x256xf32>
    %cst_27 = arith.constant 0.000000e+00 : f32
    %56 = vector.broadcast %cst_27 : f32 to vector<2x1x256xf32>
    %57 = arith.select %54, %55, %56 : vector<2x1x256xi1>, vector<2x1x256xf32>
    %cst_28 = arith.constant dense<0.000000e+00> : vector<2x1xf32>
    %58 = vector.multi_reduction <add>, %57, %cst_28 [2] : vector<2x1x256xf32> to vector<2x1xf32>
    %59 = arith.extui %54 : vector<2x1x256xi1> to vector<2x1x256xi32>
    %60 = arith.sitofp %59 : vector<2x1x256xi32> to vector<2x1x256xf32>
    %cst_29 = arith.constant dense<0.000000e+00> : vector<2x1xf32>
    %61 = vector.multi_reduction <add>, %60, %cst_29 [2] : vector<2x1x256xf32> to vector<2x1xf32>
    %62 = arith.divf %58, %61 : vector<2x1xf32>
    %63 = vector.shape_cast %62 : vector<2x1xf32> to vector<1x2x1xf32>
    %cst_30 = arith.constant dense<0.000000e+00> : vector<1xf32>
    %64 = vector.multi_reduction <add>, %63, %cst_30 [1, 2] : vector<1x2x1xf32> to vector<1xf32>
    %65 = vector.shape_cast %64 : vector<1xf32> to vector<1x1x1xf32>
    %66 = vector.extract %65[0, 0, 0] : f32 from vector<1x1x1xf32>
    %cst_31 = arith.constant 2.000000e+00 : f32
    %67 = arith.divf %66, %cst_31 : f32
    %c0_i32_32 = arith.constant 0 : i32
    %68 = vector.broadcast %c0_i32_32 : i32 to vector<2x1x128xi32>
    %69 = arith.cmpi sgt, %5, %68 : vector<2x1x128xi32>
    %70 = arith.extui %69 : vector<2x1x128xi1> to vector<2x1x128xi32>
    %71 = arith.sitofp %70 : vector<2x1x128xi32> to vector<2x1x128xf32>
    %72 = vector.extract_strided_slice %1 {offsets = [0, 0, 0], sizes = [2, 4, 128], strides = [1, 1, 1]} : vector<2x8x128xf32> to vector<2x4x128xf32>
    %73 = vector.extract_strided_slice %1 {offsets = [0, 4, 0], sizes = [2, 4, 128], strides = [1, 1, 1]} : vector<2x8x128xf32> to vector<2x4x128xf32>
    %74 = arith.subf %72, %73 : vector<2x4x128xf32>
    %75 = vector.broadcast %71 : vector<2x1x128xf32> to vector<2x4x128xf32>
    %76 = arith.mulf %75, %74 : vector<2x4x128xf32>
    %77 = math.absf %76 : vector<2x4x128xf32>
    %cst_33 = arith.constant 1.000000e+00 : f32
    %78 = vector.broadcast %cst_33 : f32 to vector<2x4x128xf32>
    %79 = arith.cmpf olt, %77, %78 : vector<2x4x128xf32>
    %cst_34 = arith.constant 5.000000e-01 : f32
    %80 = vector.broadcast %cst_34 : f32 to vector<2x4x128xf32>
    %81 = arith.mulf %80, %76 : vector<2x4x128xf32>
    %82 = arith.mulf %81, %76 : vector<2x4x128xf32>
    %cst_35 = arith.constant 5.000000e-01 : f32
    %83 = vector.broadcast %cst_35 : f32 to vector<2x4x128xf32>
    %84 = arith.subf %77, %83 : vector<2x4x128xf32>
    %85 = arith.select %79, %82, %84 : vector<2x4x128xi1>, vector<2x4x128xf32>
    %86 = vector.shape_cast %85 : vector<2x4x128xf32> to vector<1x2x4x128xf32>
    %cst_36 = arith.constant dense<0.000000e+00> : vector<1xf32>
    %87 = vector.multi_reduction <add>, %86, %cst_36 [1, 2, 3] : vector<1x2x4x128xf32> to vector<1xf32>
    %88 = vector.shape_cast %87 : vector<1xf32> to vector<1x1x1x1xf32>
    %89 = vector.extract %88[0, 0, 0, 0] : f32 from vector<1x1x1x1xf32>
    %c0_i32_37 = arith.constant 0 : i32
    %90 = vector.broadcast %c0_i32_37 : i32 to vector<2x1x128xi32>
    %91 = arith.cmpi sge, %5, %90 : vector<2x1x128xi32>
    %92 = arith.extui %91 : vector<2x1x128xi1> to vector<2x1x128xi32>
    %93 = arith.sitofp %92 : vector<2x1x128xi32> to vector<2x1x128xf32>
    %94 = vector.shape_cast %93 : vector<2x1x128xf32> to vector<1x2x1x128xf32>
    %cst_38 = arith.constant dense<0.000000e+00> : vector<1xf32>
    %95 = vector.multi_reduction <add>, %94, %cst_38 [1, 2, 3] : vector<1x2x1x128xf32> to vector<1xf32>
    %96 = vector.shape_cast %95 : vector<1xf32> to vector<1x1x1x1xf32>
    %97 = vector.extract %96[0, 0, 0, 0] : f32 from vector<1x1x1x1xf32>
    %98 = arith.divf %89, %97 : f32
    %cst_39 = arith.constant dense<0xFF800000> : vector<2x128xf32>
    %99 = vector.multi_reduction <maximumf>, %3, %cst_39 [1] : vector<2x5x128xf32> to vector<2x128xf32>
    %100 = vector.shape_cast %99 : vector<2x128xf32> to vector<2x1x128xf32>
    %101 = vector.broadcast %100 : vector<2x1x128xf32> to vector<2x5x128xf32>
    %102 = arith.subf %3, %101 : vector<2x5x128xf32>
    %103 = math.exp %102 : vector<2x5x128xf32>
    %cst_40 = arith.constant dense<0.000000e+00> : vector<2x128xf32>
    %104 = vector.multi_reduction <add>, %103, %cst_40 [1] : vector<2x5x128xf32> to vector<2x128xf32>
    %105 = vector.shape_cast %104 : vector<2x128xf32> to vector<2x1x128xf32>
    %106 = math.log %105 : vector<2x1x128xf32>
    %107 = arith.addf %100, %106 : vector<2x1x128xf32>
    %108 = tpu.iota {dimensions = array<i32: 1>} : vector<2x5x128xi32>
    %109 = vector.broadcast %5 : vector<2x1x128xi32> to vector<2x5x128xi32>
    %110 = arith.cmpi eq, %108, %109 : vector<2x5x128xi32>
    %cst_41 = arith.constant 0.000000e+00 : f32
    %111 = vector.broadcast %cst_41 : f32 to vector<2x5x128xf32>
    %112 = arith.select %110, %3, %111 : vector<2x5x128xi1>, vector<2x5x128xf32>
    %cst_42 = arith.constant dense<0.000000e+00> : vector<2x128xf32>
    %113 = vector.multi_reduction <add>, %112, %cst_42 [1] : vector<2x5x128xf32> to vector<2x128xf32>
    %114 = vector.shape_cast %113 : vector<2x128xf32> to vector<2x1x128xf32>
    %c0_i32_43 = arith.constant 0 : i32
    %115 = vector.broadcast %c0_i32_43 : i32 to vector<2x1x128xi32>
    %116 = arith.cmpi sge, %5, %115 : vector<2x1x128xi32>
    %117 = arith.subf %107, %114 : vector<2x1x128xf32>
    %cst_44 = arith.constant 0.000000e+00 : f32
    %118 = vector.broadcast %cst_44 : f32 to vector<2x1x128xf32>
    %119 = arith.select %116, %117, %118 : vector<2x1x128xi1>, vector<2x1x128xf32>
    %cst_45 = arith.constant dense<0.000000e+00> : vector<2x1xf32>
    %120 = vector.multi_reduction <add>, %119, %cst_45 [2] : vector<2x1x128xf32> to vector<2x1xf32>
    %121 = arith.extui %116 : vector<2x1x128xi1> to vector<2x1x128xi32>
    %122 = arith.sitofp %121 : vector<2x1x128xi32> to vector<2x1x128xf32>
    %cst_46 = arith.constant dense<0.000000e+00> : vector<2x1xf32>
    %123 = vector.multi_reduction <add>, %122, %cst_46 [2] : vector<2x1x128xf32> to vector<2x1xf32>
    %124 = arith.divf %120, %123 : vector<2x1xf32>
    %125 = vector.shape_cast %124 : vector<2x1xf32> to vector<1x2x1xf32>
    %cst_47 = arith.constant dense<0.000000e+00> : vector<1xf32>
    %126 = vector.multi_reduction <add>, %125, %cst_47 [1, 2] : vector<1x2x1xf32> to vector<1xf32>
    %127 = vector.shape_cast %126 : vector<1xf32> to vector<1x1x1xf32>
    %128 = vector.extract %127[0, 0, 0] : f32 from vector<1x1x1xf32>
    %cst_48 = arith.constant 2.000000e+00 : f32
    %129 = arith.divf %128, %cst_48 : f32
    %c0_49 = arith.constant 0 : index
    %130 = memref.load %arg6[%c0_49] : memref<5xf32, #tpu.memory_space<smem>>
    memref.store %36, %arg6[%c0_49] : memref<5xf32, #tpu.memory_space<smem>>
    %c1 = arith.constant 1 : index
    %131 = memref.load %arg6[%c1] : memref<5xf32, #tpu.memory_space<smem>>
    memref.store %67, %arg6[%c1] : memref<5xf32, #tpu.memory_space<smem>>
    %c2 = arith.constant 2 : index
    %132 = memref.load %arg6[%c2] : memref<5xf32, #tpu.memory_space<smem>>
    memref.store %98, %arg6[%c2] : memref<5xf32, #tpu.memory_space<smem>>
    %c3 = arith.constant 3 : index
    %133 = memref.load %arg6[%c3] : memref<5xf32, #tpu.memory_space<smem>>
    memref.store %129, %arg6[%c3] : memref<5xf32, #tpu.memory_space<smem>>
    %134 = arith.addf %36, %67 : f32
    %135 = arith.addf %134, %98 : f32
    %136 = arith.addf %135, %129 : f32
    %c4 = arith.constant 4 : index
    %137 = memref.load %arg6[%c4] : memref<5xf32, #tpu.memory_space<smem>>
    memref.store %136, %arg6[%c4] : memref<5xf32, #tpu.memory_space<smem>>
    return
  }
}

</mosaic_0001>

<llo_original>
// kernel: frcnn_trainer_forward.1
$region0: #{frcnn_trainer_forward.1}
  #allocation0 [shape = 'u32[]', space=smem, size = 0x4, offset = 0x4, fixed_abs, tag = 'smem constant byte address 0x4 - core index']
  #allocation1 [shape = 'u32[144,128]{1,0:T(1,128)}', space=vmem, size = 0x12000, scoped, tag = 'internal scratch']
  %s0 = inlined_call_operand.vmem [shape: f32[2,8,256], index: 0, kind: input, shape index: {}]
  %s1 = inlined_call_operand.vmem [shape: f32[2,2,256], index: 1, kind: input, shape index: {}]
  %s2 = inlined_call_operand.vmem [shape: s32[2,1,256], index: 2, kind: input, shape index: {}]
  %s3 = inlined_call_operand.vmem [shape: f32[2,8,128], index: 3, kind: input, shape index: {}]
  %s4 = inlined_call_operand.vmem [shape: f32[2,5,128], index: 4, kind: input, shape index: {}]
  %s5 = inlined_call_operand.vmem [shape: s32[2,1,128], index: 5, kind: input, shape index: {}]
  %s6 = inlined_call_operand.vmem [shape: f32[5], index: 6, kind: output, shape index: {}]
  %s7 = sld [smem:[#allocation0]]
  $region34: #{frcnn_trainer_forward.1} parent=0
    _
  %s9 = ssub.s32 1, %s7
  %s10 = scalar_select 0, %s9, %s7
  $region1: #{frcnn_trainer_forward.1} parent=0
    #allocation2 [shape = 'u8[512]{0}', space=smem, size = 0x200, scoped, tag = 'output window, operand 0, single buffered']
    #allocation3 [shape = 's32[1]{0}', space=sflag, size = 0x4, scoped, tag = 'scoped memory for frcnn_trainer_forward.1']
    %11 = vsyncpa [#allocation3], 0
    // Predicated region
    $region2: #{frcnn_trainer_forward.1} parent=1 // pred_check
      _
    $region3: #{frcnn_trainer_forward.1} parent=1 // pred_check_branch
      %13 = sbr.rel (0) target = $region5
    $region4: #{frcnn_trainer_forward.1} parent=1 // pred_region
      _
    $region5: #{frcnn_trainer_forward.1} parent=1 // pred_fallthru
      _
    // Predicated region
    $region6: #{frcnn_trainer_forward.1} parent=1 // pred_check
      _
    $region7: #{frcnn_trainer_forward.1} parent=1 // pred_check_branch
      %15 = sbr.rel (0) target = $region9
    $region8: #{frcnn_trainer_forward.1} parent=1 // pred_region
      _
    $region9: #{frcnn_trainer_forward.1} parent=1 // pred_fallthru
      _
    // Predicated region
    $region10: #{frcnn_trainer_forward.1} parent=1 // pred_check
      _
    $region11: #{frcnn_trainer_forward.1} parent=1 // pred_check_branch
      %17 = sbr.rel (0) target = $region13
    $region12: #{frcnn_trainer_forward.1} parent=1 // pred_region
      _
    $region13: #{frcnn_trainer_forward.1} parent=1 // pred_fallthru
      _
    // Predicated region
    $region14: #{frcnn_trainer_forward.1} parent=1 // pred_check
      _
    $region15: #{frcnn_trainer_forward.1} parent=1 // pred_check_branch
      %19 = sbr.rel (0) target = $region17
    $region16: #{frcnn_trainer_forward.1} parent=1 // pred_region
      _
    $region17: #{frcnn_trainer_forward.1} parent=1 // pred_fallthru
      _
    // Predicated region
    $region18: #{frcnn_trainer_forward.1} parent=1 // pred_check
      _
    $region19: #{frcnn_trainer_forward.1} parent=1 // pred_check_branch
      %21 = sbr.rel (0) target = $region21
    $region20: #{frcnn_trainer_forward.1} parent=1 // pred_region
      _
    $region21: #{frcnn_trainer_forward.1} parent=1 // pred_fallthru
      _
    // Predicated region
    $region22: #{frcnn_trainer_forward.1} parent=1 // pred_check
      _
    $region23: #{frcnn_trainer_forward.1} parent=1 // pred_check_branch
      %23 = sbr.rel (0) target = $region25
    $region24: #{frcnn_trainer_forward.1} parent=1 // pred_region
      _
    $region25: #{frcnn_trainer_forward.1} parent=1 // pred_fallthru
      _
    %v24 = vld [vmem:[%s0] sm:$0xff]
    %v25 = vld [vmem:[%s0 + $0x8] sm:$0xff]
    %v26 = vld [vmem:[%s0 + $0x10] sm:$0xff]
    %v27 = vld [vmem:[%s0 + $0x18] sm:$0xff]
    %v28 = vld [vmem:[%s3] sm:$0xff]
    %v29 = vld [vmem:[%s3 + $0x8] sm:$0xff]
    %v30 = vld [vmem:[%s1] sm:$0xf]
    %v31 = vld [vmem:[%s1 + $0x4] sm:$0xf]
    %v32 = vld [vmem:[%s4] sm:$0x1f]
    %v33 = vld [vmem:[%s4 + $0x8] sm:$0x1f]
    %v34 = vld [vmem:[%s2] sm:$0x3]
    %v35 = vld [vmem:[%s2 + $0x2] sm:$0x3]
    %v36 = vld [vmem:[%s5] sm:$0x1]
    %v37 = vld [vmem:[%s5 + $0x1] sm:$0x1]
    %vm38 = vcmp.gt.s32.totalorder %v34, 0
    %vm39 = vcmp.gt.s32.totalorder %v35, 0
    %v40 = vsel %vm38, 1, 0
    %v41 = vsel %vm39, 1, 0
    %v42 = vcvt.s32.f32 %v40
    %v43 = vcvt.s32.f32 %v41
    %v48 = vrot.slane %v24, 4
    %v49 = vrot.slane %v25, 4
    %v50 = vrot.slane %v26, 4
    %v51 = vrot.slane %v27, 4
    %v56 = vsub.f32 %v24, %v48
    %v57 = vsub.f32 %v25, %v49
    %v58 = vsub.f32 %v26, %v50
    %v59 = vsub.f32 %v27, %v51
    %v62 = vlaneseq
    %v63 = vshrl.u32 %v62, 7
    %v64 = vsub.s32 0, %v63
    %v65 = vrot.slane %v42, %v64
    %v66 = vlaneseq
    %v67 = vshrl.u32 %v66, 7
    %v68 = vsub.s32 1, %v67
    %v69 = vrot.slane %v42, %v68
    %v70 = vlaneseq
    %v71 = vshrl.u32 %v70, 7
    %v72 = vsub.s32 0, %v71
    %v73 = vrot.slane %v43, %v72
    %v74 = vlaneseq
    %v75 = vshrl.u32 %v74, 7
    %v76 = vsub.s32 1, %v75
    %v77 = vrot.slane %v43, %v76
    %v82 = vmul.f32 %v65, %v56
    %v83 = vmul.f32 %v69, %v57
    %v84 = vmul.f32 %v73, %v58
    %v85 = vmul.f32 %v77, %v59
    %v86 = vand.u32 2147483647, %v82
    %v87 = vand.u32 2147483647, %v83
    %v88 = vand.u32 2147483647, %v84
    %v89 = vand.u32 2147483647, %v85
    %vm90 = vcmp.lt.f32.partialorder %v86, 0.11111111
    %vm91 = vcmp.lt.f32.partialorder %v87, 0.11111111
    %vm92 = vcmp.lt.f32.partialorder %v88, 0.11111111
    %vm93 = vcmp.lt.f32.partialorder %v89, 0.11111111
    %v94 = vmul.f32 %v82, 4.5
    %v95 = vmul.f32 %v83, 4.5
    %v96 = vmul.f32 %v84, 4.5
    %v97 = vmul.f32 %v85, 4.5
    %v98 = vmul.f32 %v94, %v82
    %v99 = vmul.f32 %v95, %v83
    %v100 = vmul.f32 %v96, %v84
    %v101 = vmul.f32 %v97, %v85
    %v102 = vsub.f32 %v86, 0.055555556
    %v103 = vsub.f32 %v87, 0.055555556
    %v104 = vsub.f32 %v88, 0.055555556
    %v105 = vsub.f32 %v89, 0.055555556
    %v106 = vsel %vm90, %v98, %v102
    %v107 = vsel %vm91, %v99, %v103
    %v108 = vsel %vm92, %v100, %v104
    %v109 = vsel %vm93, %v101, %v105
    %vm110 = vcmask 1043456
    %v111 = vsel %vm110, %v106, 0.0
    %v112 = vsel %vm110, %v107, 0.0
    %v113 = vadd.f32 %v111, %v112
    %v114 = vsel %vm110, %v108, 0.0
    %v115 = vadd.f32 %v113, %v114
    %v116 = vsel %vm110, %v109, 0.0
    %v117 = vadd.f32 %v115, %v116
    %118 = vadd.xlane.f32.xlu0 %v117
    %v119 = vpop.xlane.xlu0 %118
    %v120 = vrot.slane %v119, 4
    %v121 = vadd.f32 %v119, %v120
    %v122 = vrot.slane %v121, 2
    %v123 = vadd.f32 %v121, %v122
    %v124 = vrot.slane %v123, 1
    %v125 = vadd.f32 %v123, %v124
    %s126 = vtos %v125
    %vm127 = vcmp.ge.s32.totalorder %v34, 0
    %vm128 = vcmp.ge.s32.totalorder %v35, 0
    %v129 = vsel %vm127, 1, 0
    %v130 = vsel %vm128, 1, 0
    %v131 = vcvt.s32.f32 %v129
    %v132 = vcvt.s32.f32 %v130
    %v135 = vlaneseq
    %v136 = vshrl.u32 %v135, 7
    %v137 = vsub.s32 0, %v136
    %v138 = vrot.slane %v131, %v137
    %v139 = vlaneseq
    %v140 = vshrl.u32 %v139, 7
    %v141 = vsub.s32 1, %v140
    %v142 = vrot.slane %v131, %v141
    %v143 = vlaneseq
    %v144 = vshrl.u32 %v143, 7
    %v145 = vsub.s32 0, %v144
    %v146 = vrot.slane %v132, %v145
    %v147 = vlaneseq
    %v148 = vshrl.u32 %v147, 7
    %v149 = vsub.s32 1, %v148
    %v150 = vrot.slane %v132, %v149
    %vm155 = vcmask 1040384
    %v156 = vsel %vm155, %v138, 0.0
    %v157 = vsel %vm155, %v142, 0.0
    %v158 = vadd.f32 %v156, %v157
    %v159 = vsel %vm155, %v146, 0.0
    %v160 = vadd.f32 %v158, %v159
    %v161 = vsel %vm155, %v150, 0.0
    %v162 = vadd.f32 %v160, %v161
    %163 = vadd.xlane.f32.xlu0 %v162
    %v164 = vpop.xlane.xlu0 %163
    %v165 = vrot.slane %v164, 4
    %v166 = vadd.f32 %v164, %v165
    %v167 = vrot.slane %v166, 2
    %v168 = vadd.f32 %v166, %v167
    %v169 = vrot.slane %v168, 1
    %v170 = vadd.f32 %v168, %v169
    %s171 = vtos %v170
    %v172 = vstv %s171
    %v173 = vrcp.pop %v172
    %s174 = vtos %v173
    %s175 = smul.f32 %s126, %s174
    %v179 = vunpack.c.l.s4 1983009808
    %v180 = vunpack.c.0.s8 %v179
    %v181 = vlaneseq
    %v182 = vshrl.u32 %v181, 7
    %v183 = vsub.s32 %v180, %v182
    %v184 = vrot.slane %v30, %v183
    %v185 = vcombine.high %v184, %v184
    %v187 = vunpack.c.l.s4 1983009808
    %v188 = vunpack.c.0.s8 %v187
    %v189 = vlaneseq
    %v190 = vshrl.u32 %v189, 7
    %v191 = vsub.s32 %v188, %v190
    %v192 = vrot.slane %v31, %v191
    %v193 = vcombine.high %v192, %v192
    %vm198 = vcmask 1041408
    %v199 = vsel %vm198, %v184, -inf
    %v200 = vrot.slane %v199, 4
    %v201 = vmax.f32 %v199, %v200
    %v202 = vrot.slane %v201, 2
    %v203 = vmax.f32 %v201, %v202
    %v204 = vrot.slane %v203, 1
    %v205 = vmax.f32 %v203, %v204
    %v206 = vsel %vm198, %v185, -inf
    %v207 = vrot.slane %v206, 4
    %v208 = vmax.f32 %v206, %v207
    %v209 = vrot.slane %v208, 2
    %v210 = vmax.f32 %v208, %v209
    %v211 = vrot.slane %v210, 1
    %v212 = vmax.f32 %v210, %v211
    %v213 = vsel %vm198, %v192, -inf
    %v214 = vrot.slane %v213, 4
    %v215 = vmax.f32 %v213, %v214
    %v216 = vrot.slane %v215, 2
    %v217 = vmax.f32 %v215, %v216
    %v218 = vrot.slane %v217, 1
    %v219 = vmax.f32 %v217, %v218
    %v220 = vsel %vm198, %v193, -inf
    %v221 = vrot.slane %v220, 4
    %v222 = vmax.f32 %v220, %v221
    %v223 = vrot.slane %v222, 2
    %v224 = vmax.f32 %v222, %v223
    %v225 = vrot.slane %v224, 1
    %v226 = vmax.f32 %v224, %v225
    %v231 = vcombine.low %v205, %v212
    %v233 = vunpack.c.l.s4 1983009808
    %v234 = vunpack.c.0.s8 %v233
    %v235 = vlaneseq
    %v236 = vshrl.u32 %v235, 7
    %v237 = vsub.s32 %v234, %v236
    %v238 = vrot.slane %v231, %v237
    %v239 = vcombine.low %v219, %v226
    %v241 = vunpack.c.l.s4 1983009808
    %v242 = vunpack.c.0.s8 %v241
    %v243 = vlaneseq
    %v244 = vshrl.u32 %v243, 7
    %v245 = vsub.s32 %v242, %v244
    %v246 = vrot.slane %v239, %v245
    %v249 = vsub.f32 %v30, %v238
    %v250 = vsub.f32 %v31, %v246
    %v251 = vmul.f32 %v249, 1.442695
    %v252 = vpow.pop %v251
    %v253 = vmul.f32 %v250, 1.442695
    %v254 = vpow.pop %v253
    %v258 = vunpack.c.l.s4 1983009808
    %v259 = vunpack.c.0.s8 %v258
    %v260 = vlaneseq
    %v261 = vshrl.u32 %v260, 7
    %v262 = vsub.s32 %v259, %v261
    %v263 = vrot.slane %v252, %v262
    %v264 = vcombine.high %v263, %v263
    %v266 = vunpack.c.l.s4 1983009808
    %v267 = vunpack.c.0.s8 %v266
    %v268 = vlaneseq
    %v269 = vshrl.u32 %v268, 7
    %v270 = vsub.s32 %v267, %v269
    %v271 = vrot.slane %v254, %v270
    %v272 = vcombine.high %v271, %v271
    %v277 = vsel %vm198, %v263, 0.0
    %v278 = vrot.slane %v277, 4
    %v279 = vadd.f32 %v277, %v278
    %v280 = vrot.slane %v279, 2
    %v281 = vadd.f32 %v279, %v280
    %v282 = vrot.slane %v281, 1
    %v283 = vadd.f32 %v281, %v282
    %v284 = vsel %vm198, %v264, 0.0
    %v285 = vrot.slane %v284, 4
    %v286 = vadd.f32 %v284, %v285
    %v287 = vrot.slane %v286, 2
    %v288 = vadd.f32 %v286, %v287
    %v289 = vrot.slane %v288, 1
    %v290 = vadd.f32 %v288, %v289
    %v291 = vsel %vm198, %v271, 0.0
    %v292 = vrot.slane %v291, 4
    %v293 = vadd.f32 %v291, %v292
    %v294 = vrot.slane %v293, 2
    %v295 = vadd.f32 %v293, %v294
    %v296 = vrot.slane %v295, 1
    %v297 = vadd.f32 %v295, %v296
    %v298 = vsel %vm198, %v272, 0.0
    %v299 = vrot.slane %v298, 4
    %v300 = vadd.f32 %v298, %v299
    %v301 = vrot.slane %v300, 2
    %v302 = vadd.f32 %v300, %v301
    %v303 = vrot.slane %v302, 1
    %v304 = vadd.f32 %v302, %v303
    %v305 = vlog2.pop %v283
    %v306 = vmul.f32 %v305, 0.6931472
    %v307 = vlog2.pop %v290
    %v308 = vmul.f32 %v307, 0.6931472
    %v309 = vlog2.pop %v297
    %v310 = vmul.f32 %v309, 0.6931472
    %v311 = vlog2.pop %v304
    %v312 = vmul.f32 %v311, 0.6931472
    %v313 = vadd.f32 %v205, %v306
    %v314 = vadd.f32 %v212, %v308
    %v315 = vadd.f32 %v219, %v310
    %v316 = vadd.f32 %v226, %v312
    %v317 = vlaneseq
    %v318 = vshrl.u32 %v317, 7
    %v319 = vlaneseq
    %v320 = vshrl.u32 %v319, 7
    %v321 = vsub.s32 0, %v320
    %v322 = vrot.slane %v34, %v321
    %v323 = vlaneseq
    %v324 = vshrl.u32 %v323, 7
    %v325 = vsub.s32 1, %v324
    %v326 = vrot.slane %v34, %v325
    %v327 = vlaneseq
    %v328 = vshrl.u32 %v327, 7
    %v329 = vsub.s32 0, %v328
    %v330 = vrot.slane %v35, %v329
    %v331 = vlaneseq
    %v332 = vshrl.u32 %v331, 7
    %v333 = vsub.s32 1, %v332
    %v334 = vrot.slane %v35, %v333
    %vm335 = vcmp.eq.s32.totalorder %v318, %v322
    %vm336 = vcmp.eq.s32.totalorder %v318, %v326
    %vm337 = vcmp.eq.s32.totalorder %v318, %v330
    %vm338 = vcmp.eq.s32.totalorder %v318, %v334
    %v339 = vsel %vm335, %v184, 0.0
    %v340 = vsel %vm336, %v185, 0.0
    %v341 = vsel %vm337, %v192, 0.0
    %v342 = vsel %vm338, %v193, 0.0
    %v343 = vsel %vm198, %v339, 0.0
    %v344 = vrot.slane %v343, 4
    %v345 = vadd.f32 %v343, %v344
    %v346 = vrot.slane %v345, 2
    %v347 = vadd.f32 %v345, %v346
    %v348 = vrot.slane %v347, 1
    %v349 = vadd.f32 %v347, %v348
    %v350 = vsel %vm198, %v340, 0.0
    %v351 = vrot.slane %v350, 4
    %v352 = vadd.f32 %v350, %v351
    %v353 = vrot.slane %v352, 2
    %v354 = vadd.f32 %v352, %v353
    %v355 = vrot.slane %v354, 1
    %v356 = vadd.f32 %v354, %v355
    %v357 = vsel %vm198, %v341, 0.0
    %v358 = vrot.slane %v357, 4
    %v359 = vadd.f32 %v357, %v358
    %v360 = vrot.slane %v359, 2
    %v361 = vadd.f32 %v359, %v360
    %v362 = vrot.slane %v361, 1
    %v363 = vadd.f32 %v361, %v362
    %v364 = vsel %vm198, %v342, 0.0
    %v365 = vrot.slane %v364, 4
    %v366 = vadd.f32 %v364, %v365
    %v367 = vrot.slane %v366, 2
    %v368 = vadd.f32 %v366, %v367
    %v369 = vrot.slane %v368, 1
    %v370 = vadd.f32 %v368, %v369
    %v371 = vsub.f32 %v313, %v349
    %v372 = vsub.f32 %v314, %v356
    %v373 = vsub.f32 %v315, %v363
    %v374 = vsub.f32 %v316, %v370
    %v379 = vcombine.low %v371, %v372
    %v381 = vunpack.c.l.s4 1966171168
    %v382 = vunpack.c.0.s8 %v381
    %v383 = vlaneseq
    %v384 = vshrl.u32 %v383, 7
    %v385 = vsub.s32 %v382, %v384
    %v386 = vrot.slane %v379, %v385
    %v388 = vunpack.c.l.s4 1966171168
    %v389 = vunpack.c.0.s8 %v388
    %v390 = vlaneseq
    %v391 = vshrl.u32 %v390, 7
    %v392 = vsub.s32 %v389, %v391
    %v393 = vrot.slane %v386, %v392
    %v394 = vcombine.low %v373, %v374
    %v396 = vunpack.c.l.s4 1966171168
    %v397 = vunpack.c.0.s8 %v396
    %v398 = vlaneseq
    %v399 = vshrl.u32 %v398, 7
    %v400 = vsub.s32 %v397, %v399
    %v401 = vrot.slane %v394, %v400
    %v403 = vunpack.c.l.s4 1966171168
    %v404 = vunpack.c.0.s8 %v403
    %v405 = vlaneseq
    %v406 = vshrl.u32 %v405, 7
    %v407 = vsub.s32 %v404, %v406
    %v408 = vrot.slane %v401, %v407
    %v411 = vsel %vm127, %v393, 0.0
    %v412 = vsel %vm128, %v408, 0.0
    %v415 = vlaneseq
    %v416 = vshrl.u32 %v415, 7
    %v417 = vsub.s32 0, %v416
    %v418 = vrot.slane %v411, %v417
    %v419 = vlaneseq
    %v420 = vshrl.u32 %v419, 7
    %v421 = vsub.s32 1, %v420
    %v422 = vrot.slane %v411, %v421
    %v423 = vlaneseq
    %v424 = vshrl.u32 %v423, 7
    %v425 = vsub.s32 0, %v424
    %v426 = vrot.slane %v412, %v425
    %v427 = vlaneseq
    %v428 = vshrl.u32 %v427, 7
    %v429 = vsub.s32 1, %v428
    %v430 = vrot.slane %v412, %v429
    %v435 = vsel %vm155, %v418, 0.0
    %v436 = vsel %vm155, %v422, 0.0
    %v437 = vadd.f32 %v435, %v436
    %438 = vadd.xlane.f32.xlu0 %v437
    %v439 = vpop.xlane.xlu0 %438
    %v440 = vsel %vm155, %v426, 0.0
    %v441 = vsel %vm155, %v430, 0.0
    %v442 = vadd.f32 %v440, %v441
    %443 = vadd.xlane.f32.xlu0 %v442
    %v444 = vpop.xlane.xlu0 %443
    %445 = vadd.xlane.f32.xlu0 %v158
    %v446 = vpop.xlane.xlu0 %445
    %v447 = vadd.f32 %v159, %v161
    %448 = vadd.xlane.f32.xlu0 %v447
    %v449 = vpop.xlane.xlu0 %448
    %v450 = vrcp.pop %v446
    %v451 = vmul.f32 %v439, %v450
    %v452 = vrcp.pop %v449
    %v453 = vmul.f32 %v444, %v452
    %v456 = vrot.slane %v453, 7
    %vm457 = vcmask 1041409
    %v458 = vsel %vm457, %v456, %v451
    %vm460 = vcmask 1024
    %v461 = vsel %vm460, %v458, 0.0
    %462 = vadd.xlane.f32.xlu0 %v461
    %v463 = vpop.xlane.xlu0 %462
    %v464 = vrot.slane %v463, 4
    %v465 = vadd.f32 %v463, %v464
    %v466 = vrot.slane %v465, 2
    %v467 = vadd.f32 %v465, %v466
    %v468 = vrot.slane %v467, 1
    %v469 = vadd.f32 %v467, %v468
    %s470 = vtos %v469
    %v471 = vrcp.pop 2.0
    %s472 = vtos %v471
    %s473 = smul.f32 %s470, %s472
    %vm474 = vcmp.gt.s32.totalorder %v36, 0
    %vm475 = vcmp.gt.s32.totalorder %v37, 0
    %v476 = vsel %vm474, 1, 0
    %v477 = vsel %vm475, 1, 0
    %v478 = vcvt.s32.f32 %v476
    %v479 = vcvt.s32.f32 %v477
    %v482 = vrot.slane %v28, 4
    %v483 = vrot.slane %v29, 4
    %v486 = vsub.f32 %v28, %v482
    %v487 = vsub.f32 %v29, %v483
    %v490 = vlaneseq
    %v491 = vshrl.u32 %v490, 7
    %v492 = vsub.s32 0, %v491
    %v493 = vrot.slane %v478, %v492
    %v494 = vlaneseq
    %v495 = vshrl.u32 %v494, 7
    %v496 = vsub.s32 0, %v495
    %v497 = vrot.slane %v479, %v496
    %v500 = vmul.f32 %v493, %v486
    %v501 = vmul.f32 %v497, %v487
    %v502 = vand.u32 2147483647, %v500
    %v503 = vand.u32 2147483647, %v501
    %vm504 = vcmp.lt.f32.partialorder %v502, 1.0
    %vm505 = vcmp.lt.f32.partialorder %v503, 1.0
    %v506 = vmul.f32 %v500, 0.5
    %v507 = vmul.f32 %v501, 0.5
    %v508 = vmul.f32 %v506, %v500
    %v509 = vmul.f32 %v507, %v501
    %v510 = vsub.f32 %v502, 0.5
    %v511 = vsub.f32 %v503, 0.5
    %v512 = vsel %vm504, %v508, %v510
    %v513 = vsel %vm505, %v509, %v511
    %v514 = vsel %vm110, %v512, 0.0
    %v515 = vsel %vm110, %v513, 0.0
    %v516 = vadd.f32 %v514, %v515
    %517 = vadd.xlane.f32.xlu0 %v516
    %v518 = vpop.xlane.xlu0 %517
    %v519 = vrot.slane %v518, 4
    %v520 = vadd.f32 %v518, %v519
    %v521 = vrot.slane %v520, 2
    %v522 = vadd.f32 %v520, %v521
    %v523 = vrot.slane %v522, 1
    %v524 = vadd.f32 %v522, %v523
    %s525 = vtos %v524
    %vm526 = vcmp.ge.s32.totalorder %v36, 0
    %vm527 = vcmp.ge.s32.totalorder %v37, 0
    %v528 = vsel %vm526, 1, 0
    %v529 = vsel %vm527, 1, 0
    %v530 = vcvt.s32.f32 %v528
    %v531 = vcvt.s32.f32 %v529
    %v532 = vsel %vm155, %v530, 0.0
    %v533 = vsel %vm155, %v531, 0.0
    %v534 = vadd.f32 %v532, %v533
    %535 = vadd.xlane.f32.xlu0 %v534
    %v536 = vpop.xlane.xlu0 %535
    %v537 = vrot.slane %v536, 4
    %v538 = vadd.f32 %v536, %v537
    %v539 = vrot.slane %v538, 2
    %v540 = vadd.f32 %v538, %v539
    %v541 = vrot.slane %v540, 1
    %v542 = vadd.f32 %v540, %v541
    %s543 = vtos %v542
    %v544 = vstv %s543
    %v545 = vrcp.pop %v544
    %s546 = vtos %v545
    %s547 = smul.f32 %s525, %s546
    %vm548 = vcmask 1044480
    %v549 = vsel %vm548, %v32, -inf
    %v550 = vrot.slane %v549, 4
    %v551 = vmax.f32 %v549, %v550
    %v552 = vrot.slane %v551, 2
    %v553 = vmax.f32 %v551, %v552
    %v554 = vrot.slane %v553, 1
    %v555 = vmax.f32 %v553, %v554
    %v556 = vsel %vm548, %v33, -inf
    %v557 = vrot.slane %v556, 4
    %v558 = vmax.f32 %v556, %v557
    %v559 = vrot.slane %v558, 2
    %v560 = vmax.f32 %v558, %v559
    %v561 = vrot.slane %v560, 1
    %v562 = vmax.f32 %v560, %v561
    %v563 = vsub.f32 %v32, %v555
    %v564 = vsub.f32 %v33, %v562
    %v565 = vmul.f32 %v563, 1.442695
    %v566 = vpow.pop %v565
    %v567 = vmul.f32 %v564, 1.442695
    %v568 = vpow.pop %v567
    %v569 = vsel %vm548, %v566, 0.0
    %v570 = vrot.slane %v569, 4
    %v571 = vadd.f32 %v569, %v570
    %v572 = vrot.slane %v571, 2
    %v573 = vadd.f32 %v571, %v572
    %v574 = vrot.slane %v573, 1
    %v575 = vadd.f32 %v573, %v574
    %v576 = vsel %vm548, %v568, 0.0
    %v577 = vrot.slane %v576, 4
    %v578 = vadd.f32 %v576, %v577
    %v579 = vrot.slane %v578, 2
    %v580 = vadd.f32 %v578, %v579
    %v581 = vrot.slane %v580, 1
    %v582 = vadd.f32 %v580, %v581
    %v583 = vlog2.pop %v575
    %v584 = vmul.f32 %v583, 0.6931472
    %v585 = vlog2.pop %v582
    %v586 = vmul.f32 %v585, 0.6931472
    %v587 = vadd.f32 %v555, %v584
    %v588 = vadd.f32 %v562, %v586
    %v589 = vlaneseq
    %v590 = vshrl.u32 %v589, 7
    %v591 = vsub.s32 0, %v590
    %v592 = vrot.slane %v36, %v591
    %v593 = vlaneseq
    %v594 = vshrl.u32 %v593, 7
    %v595 = vsub.s32 0, %v594
    %v596 = vrot.slane %v37, %v595
    %vm597 = vcmp.eq.s32.totalorder %v318, %v592
    %vm598 = vcmp.eq.s32.totalorder %v318, %v596
    %v599 = vsel %vm597, %v32, 0.0
    %v600 = vsel %vm598, %v33, 0.0
    %v601 = vsel %vm548, %v599, 0.0
    %v602 = vrot.slane %v601, 4
    %v603 = vadd.f32 %v601, %v602
    %v604 = vrot.slane %v603, 2
    %v605 = vadd.f32 %v603, %v604
    %v606 = vrot.slane %v605, 1
    %v607 = vadd.f32 %v605, %v606
    %v608 = vsel %vm548, %v600, 0.0
    %v609 = vrot.slane %v608, 4
    %v610 = vadd.f32 %v608, %v609
    %v611 = vrot.slane %v610, 2
    %v612 = vadd.f32 %v610, %v611
    %v613 = vrot.slane %v612, 1
    %v614 = vadd.f32 %v612, %v613
    %v615 = vsub.f32 %v587, %v607
    %v616 = vsub.f32 %v588, %v614
    %v617 = vsel %vm526, %v615, 0.0
    %v618 = vsel %vm527, %v616, 0.0
    %v619 = vsel %vm155, %v617, 0.0
    %620 = vadd.xlane.f32.xlu0 %v619
    %v621 = vpop.xlane.xlu0 %620
    %v622 = vsel %vm155, %v618, 0.0
    %623 = vadd.xlane.f32.xlu0 %v622
    %v624 = vpop.xlane.xlu0 %623
    %625 = vadd.xlane.f32.xlu0 %v532
    %v626 = vpop.xlane.xlu0 %625
    %627 = vadd.xlane.f32.xlu0 %v533
    %v628 = vpop.xlane.xlu0 %627
    %v629 = vrcp.pop %v626
    %v630 = vmul.f32 %v621, %v629
    %v631 = vrcp.pop %v628
    %v632 = vmul.f32 %v624, %v631
    %v635 = vrot.slane %v632, 7
    %v636 = vsel %vm457, %v635, %v630
    %v638 = vsel %vm460, %v636, 0.0
    %639 = vadd.xlane.f32.xlu0 %v638
    %v640 = vpop.xlane.xlu0 %639
    %v641 = vrot.slane %v640, 4
    %v642 = vadd.f32 %v640, %v641
    %v643 = vrot.slane %v642, 2
    %v644 = vadd.f32 %v642, %v643
    %v645 = vrot.slane %v644, 1
    %v646 = vadd.f32 %v644, %v645
    %s647 = vtos %v646
    %v648 = vrcp.pop 2.0
    %s649 = vtos %v648
    %s650 = smul.f32 %s647, %s649
    %s651 = scalar_lea.smem [#allocation2], 0
    %652 = sst [smem:[%s651]] %s175
    %s653 = scalar_lea.smem [#allocation2], 1
    %654 = sst [smem:[%s653]] %s473
    %s655 = scalar_lea.smem [#allocation2], 2
    %656 = sst [smem:[%s655]] %s547
    %s657 = scalar_lea.smem [#allocation2], 3
    %658 = sst [smem:[%s657]] %s650
    %s659 = sadd.f32 %s175, %s473
    %s660 = sadd.f32 %s659, %s547
    %s661 = sadd.f32 %s660, %s650
    %s662 = scalar_lea.smem [#allocation2], 4
    %663 = sst [smem:[%s662]] %s661
    // Predicated region
    $region26: #{frcnn_trainer_forward.1} parent=1 // pred_check
      _
    $region27: #{frcnn_trainer_forward.1} parent=1 // pred_check_branch
      %665 = sbr.rel (0) target = $region29
    $region28: #{frcnn_trainer_forward.1} parent=1 // pred_region
      %s667 = ssub.s32 16, 16
      %668 = vsyncadd [#allocation3], %s667
      %s670 = sshll.u32 %s6, 4
      %s671 = int_to_ptr.vmem [resolvable:$true] %s670
      %673 = dma.smem_to_vmem [#allocation2], 16, %s671, [#allocation3]
    $region29: #{frcnn_trainer_forward.1} parent=1 // pred_fallthru
      _
    // Predicated region
    $region30: #{frcnn_trainer_forward.1} parent=1 // pred_check
      _
    $region31: #{frcnn_trainer_forward.1} parent=1 // pred_check_branch
      %675 = sbr.rel (0) target = $region33
    $region32: #{frcnn_trainer_forward.1} parent=1 // pred_region
      %676 = dma.done [#allocation3], 16
    $region33: #{frcnn_trainer_forward.1} parent=1 // pred_fallthru
      _
    %677 = sfence
    %678 = vsyncpa [#allocation3], 1

</llo_original>
